<compile_context>
chip_gen: v7x
topology: tpu7x:2x2x1
jax: 0.10.0
libtpu: 0.0.40
codegen_flags: <defaults>
</compile_context>

<pallas_src>
import jax
import jax.numpy as jnp
from jax.experimental import pallas as pl
from jax.experimental.pallas import tpu as pltpu


def _make_kernel(Cp_in, Cp_out, HW, NB, W):
    """Fused block kernel for a fixed spatial size and batch-chunk NB."""
    NBHW = NB * HW
    # Flattened-lane offsets of the 9 taps of a 3x3, pad=1 convolution.
    tap_off = [((k // 3) - 1) * W + ((k % 3) - 1) for k in range(9)]

    def kernel(x_ref, mask_ref, bn_ref, w1_ref, w2_ref, o_ref):
        # Packed per-channel params (static, sublane-aligned slices).
        s1 = bn_ref[0:Cp_in, :]                         # (Cp_in, 1)  bn1 scale
        b1 = bn_ref[Cp_in:2 * Cp_in, :]                 # (Cp_in, 1)  bn1 shift
        b2 = bn_ref[2 * Cp_in:2 * Cp_in + Cp_out, :]    # (Cp_out, 1) bn2 shift

        masks = mask_ref[...]                           # (8, NBHW), loaded once

        # Hoisted per-tap boundary masks: sublane-broadcast once per grid step
        # and reused by both convolutions (no per-image / per-conv re-broadcast).
        def make_masks(C):
            return [jnp.broadcast_to(masks[j:j + 1, :], (C, NBHW))
                    for j in range(8)]
        mb_in = make_masks(Cp_in)
        mb_out = mb_in if Cp_out == Cp_in else make_masks(Cp_out)

        def im2col(z, mb):
            # z: (C, NBHW) -> (9*C, NBHW), tap-major / channel-minor patches.
            cols = []
            for k, off in enumerate(tap_off):
                if off == 0:
                    cols.append(z)                      # centre tap, always valid
                else:
                    j = k if k < 4 else k - 1           # mask row (centre skipped)
                    shifted = pltpu.roll(z, shift=(-off) % NBHW, axis=1)
                    cols.append(shifted * mb[j])        # zero out-of-image lanes
            return jnp.concatenate(cols, axis=0)

        x = x_ref[...]                                  # (Cp_in, NBHW)
        a = jnp.maximum(x * s1 + b1, 0.0)               # relu(bn1(x))

        # conv1 (3x3, pad=1) with bn2 scale folded in -> one matmul; bn2 shift
        # as bias; relu.
        h = jnp.dot(w1_ref[...], im2col(a, mb_in),
                    preferred_element_type=jnp.float32) + b2
        b = jnp.maximum(h, 0.0)                         # (Cp_out, NBHW)

        # conv2 (3x3) and the 1x1 skip on `a`, fused into a single matmul over
        # the stacked patch matrix [im2col(b) | a].
        patches = jnp.concatenate([im2col(b, mb_out), a], axis=0)
        o_ref[...] = jnp.dot(w2_ref[...], patches,
                             preferred_element_type=jnp.float32)

    return kernel


def wide_resnet_block(x_nchw, params, *, images_per_step=None):
    """x_nchw: (N, Cin, H, W) float32. Returns (N, Cout, H, W)."""
    N, Cin, H, W = x_nchw.shape
    Cout = params['w1'].shape[0]
    HW = H * W
    eps = 1e-5

    # Pad channel counts to full sublane tiles (zeros everywhere -> exact).
    Cp_in = -(-Cin // 8) * 8
    Cp_out = -(-Cout // 8) * 8

    def padv(v, C):
        return jnp.pad(v, (0, C - v.shape[0]))

    # Fold BN (eval mode) into per-channel scale/shift.
    s1 = params['g1'] / jnp.sqrt(params['v1'] + eps)
    sh1 = params['be1'] - params['m1'] * s1
    s2 = params['g2'] / jnp.sqrt(params['v2'] + eps)
    sh2 = params['be2'] - params['m2'] * s2

    # Single packed per-channel vector: [s1 | sh1 | sh2], channel-padded.
    bn_packed = jnp.concatenate(
        [padv(s1, Cp_in), padv(sh1, Cp_in), padv(sh2, Cp_out)]
    ).reshape(-1, 1).astype(jnp.float32)

    # conv1: OIHW -> (Cp_out, 9*Cp_in) (tap-major, cin-minor), bn2 scale folded
    # into rows; bn2 shift becomes a bias after the matmul.
    w1 = jnp.transpose(params['w1'], (0, 2, 3, 1))                # (Cout,3,3,Cin)
    w1 = jnp.pad(w1, ((0, Cp_out - Cout), (0, 0), (0, 0), (0, Cp_in - Cin)))
    w1 = w1.reshape(Cp_out, 9 * Cp_in)
    w1 = padv(s2, Cp_out)[:, None] * w1

    # conv2 weights and the 1x1 skip stacked along K -> one fused matmul.
    w2 = jnp.transpose(params['w2'], (0, 2, 3, 1))                # (Cout,3,3,Cout)
    w2 = jnp.pad(w2, ((0, Cp_out - Cout), (0, 0), (0, 0), (0, Cp_out - Cout)))
    w2 = w2.reshape(Cp_out, 9 * Cp_out)
    ws = params['ws'].reshape(Cout, Cin)
    ws = jnp.pad(ws, ((0, Cp_out - Cout), (0, Cp_in - Cin)))
    w2full = jnp.concatenate([w2, ws], axis=1)        # (Cp_out, 9*Cp_out+Cp_in)

    # Images per grid step: fold several images into the lane axis to amortize
    # per-step overhead, but keep >= 2 grid steps so both v7x TCs get work.
    # Cap at 32 so the im2col patch slabs stay well inside default scoped VMEM.
    if images_per_step is None:
        images_per_step = 1
        for cand in (32, 16, 8, 4, 2):
            if N % cand == 0 and N // cand >= 2:
                images_per_step = cand
                break
    NB = images_per_step
    assert N % NB == 0, "batch must be divisible by images_per_step"
    NBHW = NB * HW

    # 3x3 tap validity masks over the flattened spatial axis, tiled across the
    # NB images of a grid step (so cross-image roll wrap is zeroed too).
    hh = jnp.arange(H).reshape(H, 1)
    ww = jnp.arange(W).reshape(1, W)
    rows = []
    for k in range(9):
        if k == 4:
            continue
        dh, dw = k // 3 - 1, k % 3 - 1
        valid = ((hh + dh >= 0) & (hh + dh < H) &
                 (ww + dw >= 0) & (ww + dw < W))
        rows.append(jnp.tile(valid.reshape(1, HW), (1, NB)))
    masks = jnp.concatenate(rows, axis=0).astype(jnp.float32)     # (8, NB*HW)

    # Batch folded into the lane axis: (N,Cin,HW) -> (Cp_in, N*HW).
    x_c = jnp.transpose(x_nchw.reshape(N, Cin, HW).astype(jnp.float32),
                        (1, 0, 2))                                # (Cin, N, HW)
    x_c = jnp.pad(x_c, ((0, Cp_in - Cin), (0, 0), (0, 0)))
    x_c = x_c.reshape(Cp_in, N * HW)

    kernel = _make_kernel(Cp_in, Cp_out, HW, NB, W)

    out_flat = pl.pallas_call(
        kernel,
        out_shape=jax.ShapeDtypeStruct((Cp_out, N * HW), jnp.float32),
        grid=(N // NB,),
        in_specs=[
            pl.BlockSpec((Cp_in, NBHW), lambda i: (0, i)),
            pl.BlockSpec((8, NBHW), lambda i: (0, 0)),
            pl.BlockSpec((2 * Cp_in + Cp_out, 1), lambda i: (0, 0)),
            pl.BlockSpec((Cp_out, 9 * Cp_in), lambda i: (0, 0)),
            pl.BlockSpec((Cp_out, 9 * Cp_out + Cp_in), lambda i: (0, 0)),
        ],
        out_specs=pl.BlockSpec((Cp_out, NBHW), lambda i: (0, i)),
        compiler_params=pltpu.CompilerParams(
            dimension_semantics=("parallel",)),
    )(x_c,
      masks,
      bn_packed,
      w1.astype(jnp.float32),
      w2full.astype(jnp.float32))

    out = out_flat[:Cout].reshape(Cout, N, HW)
    return jnp.transpose(out, (1, 0, 2)).reshape(N, Cout, H, W)


def reference_forward(x_nchw, params):
    """Pure-JAX reference replicating the PyTorch forward (eval-mode BN)."""
    eps = 1e-5

    def bn(x, g, be, m, v):
        g = g[None, :, None, None]
        be = be[None, :, None, None]
        m = m[None, :, None, None]
        v = v[None, :, None, None]
        return g * (x - m) / jnp.sqrt(v + eps) + be

    dn = ('NCHW', 'OIHW', 'NCHW')
    a = jax.nn.relu(bn(x_nchw, params['g1'], params['be1'],
                       params['m1'], params['v1']))
    c1 = jax.lax.conv_general_dilated(a, params['w1'], (1, 1),
                                      ((1, 1), (1, 1)), dimension_numbers=dn)
    b = jax.nn.relu(bn(c1, params['g2'], params['be2'],
                       params['m2'], params['v2']))
    c2 = jax.lax.conv_general_dilated(b, params['w2'], (1, 1),
                                      ((1, 1), (1, 1)), dimension_numbers=dn)
    sc = jax.lax.conv_general_dilated(a, params['ws'], (1, 1),
                                      ((0, 0), (0, 0)), dimension_numbers=dn)
    return c2 + sc


if __name__ == "__main__":
    N, Cin, Cout, H, W = 2, 4, 8, 16, 16

    key = jax.random.PRNGKey(0)
    keys = jax.random.split(key, 12)

    params = {
        # bn1
        'g1': jax.random.uniform(keys[0], (Cin,), jnp.float32, 0.5, 1.5),
        'be1': 0.1 * jax.random.normal(keys[1], (Cin,), jnp.float32),
        'm1': 0.1 * jax.random.normal(keys[2], (Cin,), jnp.float32),
        'v1': jax.random.uniform(keys[3], (Cin,), jnp.float32, 0.5, 1.5),
        # conv1 (3x3, Cin->Cout)
        'w1': 0.2 * jax.random.normal(keys[4], (Cout, Cin, 3, 3), jnp.float32),
        # bn2
        'g2': jax.random.uniform(keys[5], (Cout,), jnp.float32, 0.5, 1.5),
        'be2': 0.1 * jax.random.normal(keys[6], (Cout,), jnp.float32),
        'm2': 0.1 * jax.random.normal(keys[7], (Cout,), jnp.float32),
        'v2': jax.random.uniform(keys[8], (Cout,), jnp.float32, 0.5, 1.5),
        # conv2 (3x3, Cout->Cout)
        'w2': 0.2 * jax.random.normal(keys[9], (Cout, Cout, 3, 3), jnp.float32),
        # skip conv1x1 (Cin->Cout)
        'ws': 0.2 * jax.random.normal(keys[10], (Cout, Cin, 1, 1), jnp.float32),
    }

    x = jax.random.normal(keys[11], (N, Cin, H, W), jnp.float32)

    out = jax.block_until_ready(wide_resnet_block(x, params))
    ref = jax.block_until_ready(reference_forward(x, params))

    assert out.shape == (N, Cout, H, W)
    assert jnp.allclose(out, ref, atol=1e-4, rtol=1e-4), (
        f"max abs diff {jnp.max(jnp.abs(out - ref))}")

    print("KERNEL_OK")
</pallas_src>

<mosaic_0001>
module attributes {stable_mosaic.version = 11 : i64} {
  func.func @kernel(%arg0: i32, %arg1: memref<8x256xf32, #tpu.memory_space<vmem>>, %arg2: memref<8x256xf32, #tpu.memory_space<vmem>>, %arg3: memref<24x1xf32, #tpu.memory_space<vmem>>, %arg4: memref<8x72xf32, #tpu.memory_space<vmem>>, %arg5: memref<8x80xf32, #tpu.memory_space<vmem>>, %arg6: memref<8x256xf32, #tpu.memory_space<vmem>>) attributes {dimension_semantics = [#tpu.dimension_semantics<parallel>], iteration_bounds = array<i64: 2>, scalar_prefetch = 0 : i64, scratch_operands = 0 : i64, tpu.core_type = #tpu.core_type<tc>, window_params = [{transform_indices = @transform_0, window_bounds = array<i64: 8, 256>}, {pipeline_mode = #tpu.pipeline_mode<synchronous>, transform_indices = @transform_1, window_bounds = array<i64: 8, 256>}, {pipeline_mode = #tpu.pipeline_mode<synchronous>, transform_indices = @transform_2, window_bounds = array<i64: 24, 1>}, {pipeline_mode = #tpu.pipeline_mode<synchronous>, transform_indices = @transform_3, window_bounds = array<i64: 8, 72>}, {pipeline_mode = #tpu.pipeline_mode<synchronous>, transform_indices = @transform_4, window_bounds = array<i64: 8, 80>}, {transform_indices = @transform_5, window_bounds = array<i64: 8, 256>}]} {
    %c0 = arith.constant 0 : index
    %c0_0 = arith.constant 0 : index
    %0 = vector.load %arg3[%c0, %c0_0] : memref<24x1xf32, #tpu.memory_space<vmem>>, vector<8x1xf32>
    %c8 = arith.constant 8 : index
    %c0_1 = arith.constant 0 : index
    %1 = vector.load %arg3[%c8, %c0_1] : memref<24x1xf32, #tpu.memory_space<vmem>>, vector<8x1xf32>
    %c16 = arith.constant 16 : index
    %c0_2 = arith.constant 0 : index
    %2 = vector.load %arg3[%c16, %c0_2] : memref<24x1xf32, #tpu.memory_space<vmem>>, vector<8x1xf32>
    %c0_3 = arith.constant 0 : index
    %c0_4 = arith.constant 0 : index
    %3 = vector.load %arg2[%c0_3, %c0_4] : memref<8x256xf32, #tpu.memory_space<vmem>>, vector<8x256xf32>
    %4 = vector.extract_strided_slice %3 {offsets = [0, 0], sizes = [1, 256], strides = [1, 1]} : vector<8x256xf32> to vector<1x256xf32>
    %5 = vector.shape_cast %4 : vector<1x256xf32> to vector<1x256xf32>
    %6 = vector.broadcast %5 : vector<1x256xf32> to vector<8x256xf32>
    %7 = vector.extract_strided_slice %3 {offsets = [1, 0], sizes = [1, 256], strides = [1, 1]} : vector<8x256xf32> to vector<1x256xf32>
    %8 = vector.shape_cast %7 : vector<1x256xf32> to vector<1x256xf32>
    %9 = vector.broadcast %8 : vector<1x256xf32> to vector<8x256xf32>
    %10 = vector.extract_strided_slice %3 {offsets = [2, 0], sizes = [1, 256], strides = [1, 1]} : vector<8x256xf32> to vector<1x256xf32>
    %11 = vector.shape_cast %10 : vector<1x256xf32> to vector<1x256xf32>
    %12 = vector.broadcast %11 : vector<1x256xf32> to vector<8x256xf32>
    %13 = vector.extract_strided_slice %3 {offsets = [3, 0], sizes = [1, 256], strides = [1, 1]} : vector<8x256xf32> to vector<1x256xf32>
    %14 = vector.shape_cast %13 : vector<1x256xf32> to vector<1x256xf32>
    %15 = vector.broadcast %14 : vector<1x256xf32> to vector<8x256xf32>
    %16 = vector.extract_strided_slice %3 {offsets = [4, 0], sizes = [1, 256], strides = [1, 1]} : vector<8x256xf32> to vector<1x256xf32>
    %17 = vector.shape_cast %16 : vector<1x256xf32> to vector<1x256xf32>
    %18 = vector.broadcast %17 : vector<1x256xf32> to vector<8x256xf32>
    %19 = vector.extract_strided_slice %3 {offsets = [5, 0], sizes = [1, 256], strides = [1, 1]} : vector<8x256xf32> to vector<1x256xf32>
    %20 = vector.shape_cast %19 : vector<1x256xf32> to vector<1x256xf32>
    %21 = vector.broadcast %20 : vector<1x256xf32> to vector<8x256xf32>
    %22 = vector.extract_strided_slice %3 {offsets = [6, 0], sizes = [1, 256], strides = [1, 1]} : vector<8x256xf32> to vector<1x256xf32>
    %23 = vector.shape_cast %22 : vector<1x256xf32> to vector<1x256xf32>
    %24 = vector.broadcast %23 : vector<1x256xf32> to vector<8x256xf32>
    %25 = vector.extract_strided_slice %3 {offsets = [7, 0], sizes = [1, 256], strides = [1, 1]} : vector<8x256xf32> to vector<1x256xf32>
    %26 = vector.shape_cast %25 : vector<1x256xf32> to vector<1x256xf32>
    %27 = vector.broadcast %26 : vector<1x256xf32> to vector<8x256xf32>
    %c0_5 = arith.constant 0 : index
    %c0_6 = arith.constant 0 : index
    %28 = vector.load %arg1[%c0_5, %c0_6] : memref<8x256xf32, #tpu.memory_space<vmem>>, vector<8x256xf32>
    %29 = vector.broadcast %0 : vector<8x1xf32> to vector<8x256xf32>
    %30 = arith.mulf %28, %29 : vector<8x256xf32>
    %31 = vector.broadcast %1 : vector<8x1xf32> to vector<8x256xf32>
    %32 = arith.addf %30, %31 : vector<8x256xf32>
    %cst = arith.constant 0.000000e+00 : f32
    %33 = vector.broadcast %cst : f32 to vector<8x256xf32>
    %34 = arith.maximumf %32, %33 : vector<8x256xf32>
    %c0_7 = arith.constant 0 : index
    %c0_8 = arith.constant 0 : index
    %35 = vector.load %arg4[%c0_7, %c0_8] : memref<8x72xf32, #tpu.memory_space<vmem>>, vector<8x72xf32>
    %c17_i32 = arith.constant 17 : i32
    %36 = tpu.dynamic_rotate %34 by %c17_i32 dim 1 : vector<8x256xf32>, i32 -> vector<8x256xf32>
    %37 = arith.mulf %36, %6 : vector<8x256xf32>
    %c16_i32 = arith.constant 16 : i32
    %38 = tpu.dynamic_rotate %34 by %c16_i32 dim 1 : vector<8x256xf32>, i32 -> vector<8x256xf32>
    %39 = arith.mulf %38, %9 : vector<8x256xf32>
    %c15_i32 = arith.constant 15 : i32
    %40 = tpu.dynamic_rotate %34 by %c15_i32 dim 1 : vector<8x256xf32>, i32 -> vector<8x256xf32>
    %41 = arith.mulf %40, %12 : vector<8x256xf32>
    %c1_i32 = arith.constant 1 : i32
    %42 = tpu.dynamic_rotate %34 by %c1_i32 dim 1 : vector<8x256xf32>, i32 -> vector<8x256xf32>
    %43 = arith.mulf %42, %15 : vector<8x256xf32>
    %c255_i32 = arith.constant 255 : i32
    %44 = tpu.dynamic_rotate %34 by %c255_i32 dim 1 : vector<8x256xf32>, i32 -> vector<8x256xf32>
    %45 = arith.mulf %44, %18 : vector<8x256xf32>
    %c241_i32 = arith.constant 241 : i32
    %46 = tpu.dynamic_rotate %34 by %c241_i32 dim 1 : vector<8x256xf32>, i32 -> vector<8x256xf32>
    %47 = arith.mulf %46, %21 : vector<8x256xf32>
    %c240_i32 = arith.constant 240 : i32
    %48 = tpu.dynamic_rotate %34 by %c240_i32 dim 1 : vector<8x256xf32>, i32 -> vector<8x256xf32>
    %49 = arith.mulf %48, %24 : vector<8x256xf32>
    %c239_i32 = arith.constant 239 : i32
    %50 = tpu.dynamic_rotate %34 by %c239_i32 dim 1 : vector<8x256xf32>, i32 -> vector<8x256xf32>
    %51 = arith.mulf %50, %27 : vector<8x256xf32>
    %52 = tpu.concatenate %37, %39, %41, %43, %34, %45, %47, %49, %51 in 0 : vector<8x256xf32>, vector<8x256xf32>, vector<8x256xf32>, vector<8x256xf32>, vector<8x256xf32>, vector<8x256xf32>, vector<8x256xf32>, vector<8x256xf32>, vector<8x256xf32> -> vector<72x256xf32>
    %cst_9 = arith.constant dense<0.000000e+00> : vector<8x256xf32>
    %53 = tpu.matmul %35, %52, %cst_9 {dimension_numbers = #tpu.dot_dimension_numbers<[1], [0], [0], [1], [0, 0, 1, 1], [], []>} : vector<8x72xf32>, vector<72x256xf32>, vector<8x256xf32> -> vector<8x256xf32>
    %54 = vector.broadcast %2 : vector<8x1xf32> to vector<8x256xf32>
    %55 = arith.addf %53, %54 : vector<8x256xf32>
    %cst_10 = arith.constant 0.000000e+00 : f32
    %56 = vector.broadcast %cst_10 : f32 to vector<8x256xf32>
    %57 = arith.maximumf %55, %56 : vector<8x256xf32>
    %c17_i32_11 = arith.constant 17 : i32
    %58 = tpu.dynamic_rotate %57 by %c17_i32_11 dim 1 : vector<8x256xf32>, i32 -> vector<8x256xf32>
    %59 = arith.mulf %58, %6 : vector<8x256xf32>
    %c16_i32_12 = arith.constant 16 : i32
    %60 = tpu.dynamic_rotate %57 by %c16_i32_12 dim 1 : vector<8x256xf32>, i32 -> vector<8x256xf32>
    %61 = arith.mulf %60, %9 : vector<8x256xf32>
    %c15_i32_13 = arith.constant 15 : i32
    %62 = tpu.dynamic_rotate %57 by %c15_i32_13 dim 1 : vector<8x256xf32>, i32 -> vector<8x256xf32>
    %63 = arith.mulf %62, %12 : vector<8x256xf32>
    %c1_i32_14 = arith.constant 1 : i32
    %64 = tpu.dynamic_rotate %57 by %c1_i32_14 dim 1 : vector<8x256xf32>, i32 -> vector<8x256xf32>
    %65 = arith.mulf %64, %15 : vector<8x256xf32>
    %c255_i32_15 = arith.constant 255 : i32
    %66 = tpu.dynamic_rotate %57 by %c255_i32_15 dim 1 : vector<8x256xf32>, i32 -> vector<8x256xf32>
    %67 = arith.mulf %66, %18 : vector<8x256xf32>
    %c241_i32_16 = arith.constant 241 : i32
    %68 = tpu.dynamic_rotate %57 by %c241_i32_16 dim 1 : vector<8x256xf32>, i32 -> vector<8x256xf32>
    %69 = arith.mulf %68, %21 : vector<8x256xf32>
    %c240_i32_17 = arith.constant 240 : i32
    %70 = tpu.dynamic_rotate %57 by %c240_i32_17 dim 1 : vector<8x256xf32>, i32 -> vector<8x256xf32>
    %71 = arith.mulf %70, %24 : vector<8x256xf32>
    %c239_i32_18 = arith.constant 239 : i32
    %72 = tpu.dynamic_rotate %57 by %c239_i32_18 dim 1 : vector<8x256xf32>, i32 -> vector<8x256xf32>
    %73 = arith.mulf %72, %27 : vector<8x256xf32>
    %74 = tpu.concatenate %59, %61, %63, %65, %57, %67, %69, %71, %73 in 0 : vector<8x256xf32>, vector<8x256xf32>, vector<8x256xf32>, vector<8x256xf32>, vector<8x256xf32>, vector<8x256xf32>, vector<8x256xf32>, vector<8x256xf32>, vector<8x256xf32> -> vector<72x256xf32>
    %75 = tpu.concatenate %74, %34 in 0 : vector<72x256xf32>, vector<8x256xf32> -> vector<80x256xf32>
    %c0_19 = arith.constant 0 : index
    %c0_20 = arith.constant 0 : index
    %76 = vector.load %arg5[%c0_19, %c0_20] : memref<8x80xf32, #tpu.memory_space<vmem>>, vector<8x80xf32>
    %cst_21 = arith.constant dense<0.000000e+00> : vector<8x256xf32>
    %77 = tpu.matmul %76, %75, %cst_21 {dimension_numbers = #tpu.dot_dimension_numbers<[1], [0], [0], [1], [0, 0, 1, 1], [], []>} : vector<8x80xf32>, vector<80x256xf32>, vector<8x256xf32> -> vector<8x256xf32>
    %c0_22 = arith.constant 0 : index
    %c0_23 = arith.constant 0 : index
    %78 = vector.load %arg6[%c0_22, %c0_23] : memref<8x256xf32, #tpu.memory_space<vmem>>, vector<8x256xf32>
    tpu.vector_store %arg6[%c0_22, %c0_23], %77 {strides = array<i32>} : memref<8x256xf32, #tpu.memory_space<vmem>>, vector<8x256xf32>,
    return
  }
  func.func @transform_0(%arg0: i32) -> (i32, i32) {
    %c0_i32 = arith.constant 0 : i32
    %c0_i32_0 = arith.constant 0 : i32
    return %c0_i32, %arg0 : i32, i32
  }
  func.func @transform_1(%arg0: i32) -> (i32, i32) {
    %c0_i32 = arith.constant 0 : i32
    %c0_i32_0 = arith.constant 0 : i32
    %c0_i32_1 = arith.constant 0 : i32
    return %c0_i32, %c0_i32_0 : i32, i32
  }
  func.func @transform_2(%arg0: i32) -> (i32, i32) {
    %c0_i32 = arith.constant 0 : i32
    %c0_i32_0 = arith.constant 0 : i32
    %c0_i32_1 = arith.constant 0 : i32
    return %c0_i32, %c0_i32_0 : i32, i32
  }
  func.func @transform_3(%arg0: i32) -> (i32, i32) {
    %c0_i32 = arith.constant 0 : i32
    %c0_i32_0 = arith.constant 0 : i32
    %c0_i32_1 = arith.constant 0 : i32
    return %c0_i32, %c0_i32_0 : i32, i32
  }
  func.func @transform_4(%arg0: i32) -> (i32, i32) {
    %c0_i32 = arith.constant 0 : i32
    %c0_i32_0 = arith.constant 0 : i32
    %c0_i32_1 = arith.constant 0 : i32
    return %c0_i32, %c0_i32_0 : i32, i32
  }
  func.func @transform_5(%arg0: i32) -> (i32, i32) {
    %c0_i32 = arith.constant 0 : i32
    %c0_i32_0 = arith.constant 0 : i32
    return %c0_i32, %arg0 : i32, i32
  }
}

</mosaic_0001>

<llo_original>
// kernel: tpu_custom_call.1
$region0: #{tpu_custom_call.1}
  #allocation0 [shape = 'u32[]', space=smem, size = 0x4, offset = 0x4, fixed_abs, tag = 'smem constant byte address 0x4 - core index']
  #allocation1 [shape = 'u32[144,128]{1,0:T(1,128)}', space=vmem, size = 0x12000, scoped, tag = 'internal scratch']
  %s0 = inlined_call_operand.hbm [shape: f32[8,512], index: 0, kind: input, shape index: {}]
  %s1 = inlined_call_operand.vmem [shape: f32[8,256], index: 1, kind: input, shape index: {}]
  %s2 = inlined_call_operand.vmem [shape: f32[24,1], index: 2, kind: input, shape index: {}]
  %s3 = inlined_call_operand.vmem [shape: f32[8,72], index: 3, kind: input, shape index: {}]
  %s4 = inlined_call_operand.vmem [shape: f32[8,80], index: 4, kind: input, shape index: {}]
  %s5 = inlined_call_operand.hbm [shape: f32[8,512], index: 5, kind: output, shape index: {}]
  %s6 = sld [smem:[#allocation0]]
  $region57: #{tpu_custom_call.1} parent=0
    _
  %s8 = ssub.s32 1, %s6
  %s9 = scalar_select 0, %s8, %s6
  $region1: #{tpu_custom_call.1} parent=0
    #allocation2 [shape = 'u8[16384]{0}', space=vmem, size = 0x4000, scoped, tag = 'input window, operand 0']
    #allocation3 [shape = 's32[2]{0}', space=sflag, size = 0x8, scoped, tag = 'scoped memory for tpu_custom_call.1']
    #allocation4 [shape = 's32[2]{0}', space=sflag, size = 0x8, scoped, tag = 'scoped memory for tpu_custom_call.1']
    #allocation5 [shape = 'u8[16384]{0}', space=vmem, size = 0x4000, scoped, tag = 'output window, operand 0']
    %10 = vsyncpa [#allocation3], 0
    %s11 = scalar_lea.sflag [#allocation3], 1
    %12 = vsyncpa %s11, 0
    %13 = vsyncpa [#allocation4], 0
    %s14 = scalar_lea.sflag [#allocation4], 1
    %15 = vsyncpa %s14, 0
    loop: start=0, step=1, limit=4
    $region2: #{tpu_custom_call.1} parent=1 // loop_pre_header
      _
    $region3: #{tpu_custom_call.1} parent=1 // loop_header
      %s17 = sphi 0, %s21
      %p18 = scmp.ge.s32.totalorder %s17, 4
      %s27 = sphi 0, %s29
      %s30 = sphi 0, %s27
      %s31 = sphi 0, %s30
      %s47 = sphi 0, %s31
      %s51 = sphi 0, %s51
      %s53 = sphi 0, %s51
      %s54 = sphi 0, %s53
      %s68 = sphi 0, %s54
      %s72 = sphi 0, %s72
      %s74 = sphi 0, %s72
      %s75 = sphi 0, %s74
      %s89 = sphi 0, %s75
      %s93 = sphi 0, %s93
      %s95 = sphi 0, %s93
      %s96 = sphi 0, %s95
      %s110 = sphi 0, %s96
      %s114 = sphi 0, %s114
      %s116 = sphi 0, %s114
      %s117 = sphi 0, %s116
      %s131 = sphi 0, %s117
      %s137 = sphi 0, %s139
      %s140 = sphi 0, %s137
      %s141 = sphi 0, %s140
      %s157 = sphi 0, %s141
    $region4: #{tpu_custom_call.1} parent=1 // loop_header_branch
      %20 = sbr.rel (%p18) target = $region8
    $region5: #{tpu_custom_call.1} parent=1 // loop_body
      %s22 = ssub.s32 %s17, 1
      %s23 = ssub.s32 %s17, 2
      %s24 = sadd.s32 %s17, 1
      %s25 = ssub.s32 %s17, %s24
      %p26 = scmp.eq.s32.totalorder %s25, 0
      %s28 = sadd.s32 %s27, 1
      %s29 = scalar_select %p26, %s27, %s28
      %p32 = pneg %p26
      %p33 = scmp.eq.s32.totalorder %s17, 1
      %p34 = por %p32, %p33
      %p35 = scmp.ne.s32.totalorder %s27, %s30
      %p36 = scmp.eq.s32.totalorder %s17, 0
      %p37 = por %p35, %p36
      %p38 = scmp.ne.s32.totalorder %s27, %s30
      %p39 = scmp.eq.s32.totalorder %s22, 1
      %p40 = por %p38, %p39
      %p41 = scmp.ne.s32.totalorder %s30, %s31
      %p42 = scmp.eq.s32.totalorder %s22, 0
      %p43 = por %p41, %p42
      %p44 = scmp.ne.s32.totalorder %s30, %s31
      %p45 = scmp.eq.s32.totalorder %s23, 1
      %p46 = por %p44, %p45
      %p48 = scmp.ne.s32.totalorder %s31, %s47
      %p49 = scmp.eq.s32.totalorder %s23, 0
      %p50 = por %p48, %p49
      %s52 = sadd.s32 %s51, 1
      %p55 = scmp.eq.s32.totalorder %s17, 1
      %p56 = scmp.ne.s32.totalorder %s51, %s53
      %p57 = scmp.eq.s32.totalorder %s17, 0
      %p58 = por %p56, %p57
      %p59 = scmp.ne.s32.totalorder %s51, %s53
      %p60 = scmp.eq.s32.totalorder %s22, 1
      %p61 = por %p59, %p60
      %p62 = scmp.ne.s32.totalorder %s53, %s54
      %p63 = scmp.eq.s32.totalorder %s22, 0
      %p64 = por %p62, %p63
      %p65 = scmp.ne.s32.totalorder %s53, %s54
      %p66 = scmp.eq.s32.totalorder %s23, 1
      %p67 = por %p65, %p66
      %p69 = scmp.ne.s32.totalorder %s54, %s68
      %p70 = scmp.eq.s32.totalorder %s23, 0
      %p71 = por %p69, %p70
      %s73 = sadd.s32 %s72, 1
      %p76 = scmp.eq.s32.totalorder %s17, 1
      %p77 = scmp.ne.s32.totalorder %s72, %s74
      %p78 = scmp.eq.s32.totalorder %s17, 0
      %p79 = por %p77, %p78
      %p80 = scmp.ne.s32.totalorder %s72, %s74
      %p81 = scmp.eq.s32.totalorder %s22, 1
      %p82 = por %p80, %p81
      %p83 = scmp.ne.s32.totalorder %s74, %s75
      %p84 = scmp.eq.s32.totalorder %s22, 0
      %p85 = por %p83, %p84
      %p86 = scmp.ne.s32.totalorder %s74, %s75
      %p87 = scmp.eq.s32.totalorder %s23, 1
      %p88 = por %p86, %p87
      %p90 = scmp.ne.s32.totalorder %s75, %s89
      %p91 = scmp.eq.s32.totalorder %s23, 0
      %p92 = por %p90, %p91
      %s94 = sadd.s32 %s93, 1
      %p97 = scmp.eq.s32.totalorder %s17, 1
      %p98 = scmp.ne.s32.totalorder %s93, %s95
      %p99 = scmp.eq.s32.totalorder %s17, 0
      %p100 = por %p98, %p99
      %p101 = scmp.ne.s32.totalorder %s93, %s95
      %p102 = scmp.eq.s32.totalorder %s22, 1
      %p103 = por %p101, %p102
      %p104 = scmp.ne.s32.totalorder %s95, %s96
      %p105 = scmp.eq.s32.totalorder %s22, 0
      %p106 = por %p104, %p105
      %p107 = scmp.ne.s32.totalorder %s95, %s96
      %p108 = scmp.eq.s32.totalorder %s23, 1
      %p109 = por %p107, %p108
      %p111 = scmp.ne.s32.totalorder %s96, %s110
      %p112 = scmp.eq.s32.totalorder %s23, 0
      %p113 = por %p111, %p112
      %s115 = sadd.s32 %s114, 1
      %p118 = scmp.eq.s32.totalorder %s17, 1
      %p119 = scmp.ne.s32.totalorder %s114, %s116
      %p120 = scmp.eq.s32.totalorder %s17, 0
      %p121 = por %p119, %p120
      %p122 = scmp.ne.s32.totalorder %s114, %s116
      %p123 = scmp.eq.s32.totalorder %s22, 1
      %p124 = por %p122, %p123
      %p125 = scmp.ne.s32.totalorder %s116, %s117
      %p126 = scmp.eq.s32.totalorder %s22, 0
      %p127 = por %p125, %p126
      %p128 = scmp.ne.s32.totalorder %s116, %s117
      %p129 = scmp.eq.s32.totalorder %s23, 1
      %p130 = por %p128, %p129
      %p132 = scmp.ne.s32.totalorder %s117, %s131
      %p133 = scmp.eq.s32.totalorder %s23, 0
      %p134 = por %p132, %p133
      %s135 = ssub.s32 %s17, %s24
      %p136 = scmp.eq.s32.totalorder %s135, 0
      %s138 = sadd.s32 %s137, 1
      %s139 = scalar_select %p136, %s137, %s138
      %p142 = pneg %p136
      %p143 = scmp.eq.s32.totalorder %s17, 1
      %p144 = por %p142, %p143
      %p145 = scmp.ne.s32.totalorder %s137, %s140
      %p146 = scmp.eq.s32.totalorder %s17, 0
      %p147 = por %p145, %p146
      %p148 = scmp.ne.s32.totalorder %s137, %s140
      %p149 = scmp.eq.s32.totalorder %s22, 1
      %p150 = por %p148, %p149
      %p151 = scmp.ne.s32.totalorder %s140, %s141
      %p152 = scmp.eq.s32.totalorder %s22, 0
      %p153 = por %p151, %p152
      %p154 = scmp.ne.s32.totalorder %s140, %s141
      %p155 = scmp.eq.s32.totalorder %s23, 1
      %p156 = por %p154, %p155
      %p158 = scmp.ne.s32.totalorder %s141, %s157
      %p159 = scmp.eq.s32.totalorder %s23, 0
      %p160 = por %p158, %p159
      %p161 = scmp.le.s32.totalorder 1, %s17
      %p162 = scmp.lt.s32.totalorder %s17, 3
      %p163 = pnand %p161, %p162
      %p164 = pneg %p163
      // Predicated region
      $region9: #{tpu_custom_call.1} parent=5 // pred_check
        _
      $region10: #{tpu_custom_call.1} parent=5 // pred_check_branch
        %166 = sbr.rel (%p163) target = $region12
      $region11: #{tpu_custom_call.1} parent=5 // pred_region
        %s167 = ssub.s32 %s17, 1
        // Predicated region
        $region13: #{tpu_custom_call.1} parent=11 // pred_check
          %p168 = pneg %p64
        $region14: #{tpu_custom_call.1} parent=11 // pred_check_branch
          %170 = sbr.rel (%p168) target = $region16
        $region15: #{tpu_custom_call.1} parent=11 // pred_region
          _
        $region16: #{tpu_custom_call.1} parent=11 // pred_fallthru
          _
        // Predicated region
        $region17: #{tpu_custom_call.1} parent=11 // pred_check
          %p171 = pneg %p85
        $region18: #{tpu_custom_call.1} parent=11 // pred_check_branch
          %173 = sbr.rel (%p171) target = $region20
        $region19: #{tpu_custom_call.1} parent=11 // pred_region
          _
        $region20: #{tpu_custom_call.1} parent=11 // pred_fallthru
          _
        // Predicated region
        $region21: #{tpu_custom_call.1} parent=11 // pred_check
          %p174 = pneg %p106
        $region22: #{tpu_custom_call.1} parent=11 // pred_check_branch
          %176 = sbr.rel (%p174) target = $region24
        $region23: #{tpu_custom_call.1} parent=11 // pred_region
          _
        $region24: #{tpu_custom_call.1} parent=11 // pred_fallthru
          _
        // Predicated region
        $region25: #{tpu_custom_call.1} parent=11 // pred_check
          %p177 = pneg %p127
        $region26: #{tpu_custom_call.1} parent=11 // pred_check_branch
          %179 = sbr.rel (%p177) target = $region28
        $region27: #{tpu_custom_call.1} parent=11 // pred_region
          _
        $region28: #{tpu_custom_call.1} parent=11 // pred_fallthru
          _
      $region12: #{tpu_custom_call.1} parent=5 // pred_fallthru
        _
      %p180 = scmp.lt.s32.totalorder %s17, 2
      // Predicated region
      $region29: #{tpu_custom_call.1} parent=5 // pred_check
        %p181 = pneg %p180
      $region30: #{tpu_custom_call.1} parent=5 // pred_check_branch
        %183 = sbr.rel (%p181) target = $region32
      $region31: #{tpu_custom_call.1} parent=5 // pred_region
        // Predicated region
        $region33: #{tpu_custom_call.1} parent=31 // pred_check
          %p184 = pneg %p37
        $region34: #{tpu_custom_call.1} parent=31 // pred_check_branch
          %186 = sbr.rel (%p184) target = $region36
        $region35: #{tpu_custom_call.1} parent=31 // pred_region
          %s187 = sand.u32 %s27, 1
          %s188 = scalar_lea.sflag [#allocation3], %s187
          %s189 = sand.u32 %s27, 1
          %s190 = smul.addr %s189, 16
          %s191 = scalar_lea.vmem [#allocation2], %s190
          %s192 = smul.u32 2, %s17
          %s194 = ssub.s32 256, 256
          %195 = vsyncadd %s188, %s194
          %s196 = smul.addr %s192, 128
          %s197 = scalar_lea.hbm %s0, %s196
          %s199 = sshll.u32 %s191, 4
          %s200 = int_to_ptr.vmem [resolvable:$true] %s199
          %202 = dma.hbm_to_vmem [thread:$0]  %s197, 256, %s200, %s188
        $region36: #{tpu_custom_call.1} parent=31 // pred_fallthru
          _
      $region32: #{tpu_custom_call.1} parent=5 // pred_fallthru
        _
      %p203 = scmp.le.s32.totalorder 1, %s17
      %p204 = scmp.lt.s32.totalorder %s17, 3
      %p205 = pnand %p203, %p204
      %p206 = pneg %p205
      // Predicated region
      $region37: #{tpu_custom_call.1} parent=5 // pred_check
        _
      $region38: #{tpu_custom_call.1} parent=5 // pred_check_branch
        %208 = sbr.rel (%p205) target = $region40
      $region39: #{tpu_custom_call.1} parent=5 // pred_region
        %s209 = ssub.s32 %s17, 1
        %s210 = sand.u32 %s30, 1
        %s211 = scalar_lea.sflag [#allocation3], %s210
        %s212 = sand.u32 %s30, 1
        %s213 = smul.addr %s212, 16
        %s214 = scalar_lea.vmem [#allocation2], %s213
        // Predicated region
        $region41: #{tpu_custom_call.1} parent=39 // pred_check
          %p215 = pneg %p43
        $region42: #{tpu_custom_call.1} parent=39 // pred_check_branch
          %217 = sbr.rel (%p215) target = $region44
        $region43: #{tpu_custom_call.1} parent=39 // pred_region
          %218 = dma.done %s211, 256
        $region44: #{tpu_custom_call.1} parent=39 // pred_fallthru
          _
        %s219 = sand.u32 %s30, 1
        %s220 = scalar_lea.sflag [#allocation3], %s219
        %s221 = sand.u32 %s30, 1
        %s222 = smul.addr %s221, 16
        %s223 = scalar_lea.vmem [#allocation2], %s222
        %p224 = pneg %p43
        %p225 = pneg %p40
        %p226 = pneg %p64
        %p227 = pneg %p61
        %p228 = pneg %p85
        %p229 = pneg %p82
        %p230 = pneg %p106
        %p231 = pneg %p103
        %p232 = pneg %p127
        %p233 = pneg %p124
        %p234 = pneg %p153
        %p235 = pneg %p150
        %s236 = sand.u32 %s140, 1
        %s237 = scalar_lea.sflag [#allocation4], %s236
        %s238 = sand.u32 %s140, 1
        %s239 = smul.addr %s238, 16
        %s240 = scalar_lea.vmem [#allocation5], %s239
        %s241 = smul.u32 2, %s22
        %s242 = smul.u32 2, %s22
        %v243 = vld [vmem:[%s2] sm:$0xff]
        %v244 = vld [vmem:[%s2 + $0x8] sm:$0xff]
        %v245 = vld [vmem:[%s2 + $0x10] sm:$0xff]
        %v246 = vld [vmem:[%s1] sm:$0xff]
        %v247 = vld [vmem:[%s1 + $0x8] sm:$0xff]
        %v248 = vlaneseq
        %v249 = vshrl.u32 %v248, 7
        %v250 = vsub.s32 0, %v249
        %v251 = vrot.slane %v246, %v250
        %v252 = vlaneseq
        %v253 = vshrl.u32 %v252, 7
        %v254 = vsub.s32 0, %v253
        %v255 = vrot.slane %v247, %v254
        %v256 = vlaneseq
        %v257 = vshrl.u32 %v256, 7
        %v258 = vsub.s32 1, %v257
        %v259 = vrot.slane %v246, %v258
        %v260 = vlaneseq
        %v261 = vshrl.u32 %v260, 7
        %v262 = vsub.s32 1, %v261
        %v263 = vrot.slane %v247, %v262
        %v264 = vlaneseq
        %v265 = vshrl.u32 %v264, 7
        %v266 = vsub.s32 2, %v265
        %v267 = vrot.slane %v246, %v266
        %v268 = vlaneseq
        %v269 = vshrl.u32 %v268, 7
        %v270 = vsub.s32 2, %v269
        %v271 = vrot.slane %v247, %v270
        %v272 = vlaneseq
        %v273 = vshrl.u32 %v272, 7
        %v274 = vsub.s32 3, %v273
        %v275 = vrot.slane %v246, %v274
        %v276 = vlaneseq
        %v277 = vshrl.u32 %v276, 7
        %v278 = vsub.s32 3, %v277
        %v279 = vrot.slane %v247, %v278
        %v280 = vlaneseq
        %v281 = vshrl.u32 %v280, 7
        %v282 = vsub.s32 4, %v281
        %v283 = vrot.slane %v246, %v282
        %v284 = vlaneseq
        %v285 = vshrl.u32 %v284, 7
        %v286 = vsub.s32 4, %v285
        %v287 = vrot.slane %v247, %v286
        %v288 = vlaneseq
        %v289 = vshrl.u32 %v288, 7
        %v290 = vsub.s32 5, %v289
        %v291 = vrot.slane %v246, %v290
        %v292 = vlaneseq
        %v293 = vshrl.u32 %v292, 7
        %v294 = vsub.s32 5, %v293
        %v295 = vrot.slane %v247, %v294
        %v296 = vlaneseq
        %v297 = vshrl.u32 %v296, 7
        %v298 = vsub.s32 6, %v297
        %v299 = vrot.slane %v246, %v298
        %v300 = vlaneseq
        %v301 = vshrl.u32 %v300, 7
        %v302 = vsub.s32 6, %v301
        %v303 = vrot.slane %v247, %v302
        %v304 = vlaneseq
        %v305 = vshrl.u32 %v304, 7
        %v306 = vsub.s32 7, %v305
        %v307 = vrot.slane %v246, %v306
        %v308 = vlaneseq
        %v309 = vshrl.u32 %v308, 7
        %v310 = vsub.s32 7, %v309
        %v311 = vrot.slane %v247, %v310
        %v312 = vld [vmem:[%s214] sm:$0xff]
        %v313 = vld [vmem:[%s214 + $0x8] sm:$0xff]
        %315 = vset.pattern.permute.xlu0 0
        %316 = vperm.xlu0 %315, %v243
        %v317 = vpop.permute.xlu0 %316
        %v319 = vmul.f32 %v312, %v317
        %v320 = vmul.f32 %v313, %v317
        %322 = vset.pattern.permute.xlu0 0
        %323 = vperm.xlu0 %322, %v244
        %v324 = vpop.permute.xlu0 %323
        %v326 = vadd.f32 %v319, %v324
        %v327 = vadd.f32 %v320, %v324
        %v328 = vmax.f32 %v326, 0.0
        %v329 = vmax.f32 %v327, 0.0
        %v330 = vld [vmem:[%s3] sm:$0xff]
        %331 = vrot.lane.b32.xlu0 %v328, 17
        %v332 = vpop.permute.xlu0 %331
        %333 = vrot.lane.b32.xlu0 %v329, 17
        %v334 = vpop.permute.xlu0 %333
        %v335 = vlaneseq
        %v336 = vand.u32 %v335, 127
        %vm337 = vcmp.lt.s32.totalorder %v336, 17
        %v338 = vsel %vm337, %v332, %v334
        %v339 = vsel %vm337, %v334, %v332
        %v340 = vmul.f32 %v339, %v251
        %v341 = vmul.f32 %v338, %v255
        %342 = vrot.lane.b32.xlu0 %v328, 16
        %v343 = vpop.permute.xlu0 %342
        %344 = vrot.lane.b32.xlu0 %v329, 16
        %v345 = vpop.permute.xlu0 %344
        %vm346 = vcmp.lt.s32.totalorder %v336, 16
        %v347 = vsel %vm346, %v343, %v345
        %v348 = vsel %vm346, %v345, %v343
        %v349 = vmul.f32 %v348, %v259
        %v350 = vmul.f32 %v347, %v263
        %351 = vrot.lane.b32.xlu0 %v328, 15
        %v352 = vpop.permute.xlu0 %351
        %353 = vrot.lane.b32.xlu0 %v329, 15
        %v354 = vpop.permute.xlu0 %353
        %vm355 = vcmp.lt.s32.totalorder %v336, 15
        %v356 = vsel %vm355, %v352, %v354
        %v357 = vsel %vm355, %v354, %v352
        %v358 = vmul.f32 %v357, %v267
        %v359 = vmul.f32 %v356, %v271
        %360 = vrot.lane.b32.xlu0 %v328, 1
        %v361 = vpop.permute.xlu0 %360
        %362 = vrot.lane.b32.xlu0 %v329, 1
        %v363 = vpop.permute.xlu0 %362
        %vm364 = vcmp.lt.s32.totalorder %v336, 1
        %v365 = vsel %vm364, %v361, %v363
        %v366 = vsel %vm364, %v363, %v361
        %v367 = vmul.f32 %v366, %v275
        %v368 = vmul.f32 %v365, %v279
        %369 = vrot.lane.b32.xlu0 %v328, 127
        %v370 = vpop.permute.xlu0 %369
        %371 = vrot.lane.b32.xlu0 %v329, 127
        %v372 = vpop.permute.xlu0 %371
        %vm373 = vcmp.lt.s32.totalorder %v336, 127
        %v374 = vsel %vm373, %v370, %v372
        %v375 = vsel %vm373, %v372, %v370
        %v376 = vmul.f32 %v374, %v283
        %v377 = vmul.f32 %v375, %v287
        %378 = vrot.lane.b32.xlu0 %v328, 113
        %v379 = vpop.permute.xlu0 %378
        %380 = vrot.lane.b32.xlu0 %v329, 113
        %v381 = vpop.permute.xlu0 %380
        %vm382 = vcmp.lt.s32.totalorder %v336, 113
        %v383 = vsel %vm382, %v379, %v381
        %v384 = vsel %vm382, %v381, %v379
        %v385 = vmul.f32 %v383, %v291
        %v386 = vmul.f32 %v384, %v295
        %387 = vrot.lane.b32.xlu0 %v328, 112
        %v388 = vpop.permute.xlu0 %387
        %389 = vrot.lane.b32.xlu0 %v329, 112
        %v390 = vpop.permute.xlu0 %389
        %vm391 = vcmp.lt.s32.totalorder %v336, 112
        %v392 = vsel %vm391, %v388, %v390
        %v393 = vsel %vm391, %v390, %v388
        %v394 = vmul.f32 %v392, %v299
        %v395 = vmul.f32 %v393, %v303
        %396 = vrot.lane.b32.xlu0 %v328, 111
        %v397 = vpop.permute.xlu0 %396
        %398 = vrot.lane.b32.xlu0 %v329, 111
        %v399 = vpop.permute.xlu0 %398
        %vm400 = vcmp.lt.s32.totalorder %v336, 111
        %v401 = vsel %vm400, %v397, %v399
        %v402 = vsel %vm400, %v399, %v397
        %v403 = vmul.f32 %v401, %v307
        %v404 = vmul.f32 %v402, %v311
        %406 = vset.pattern.permute.xlu0 0
        %407 = vperm.xlu0 %406, %v245
        %v408 = vpop.permute.xlu0 %407
        %vm410 = vcmask 588800
        %v412 = vsel %vm410, %v330, 0
        %414 = vmatprep.subr.mxu0 %v341
        %415 = vmatpush1.msra.mxu0 %v340
        %416 = vmatprep.subr.mxu0 %v350
        %417 = vmatpush1.msra.mxu0 %v349
        %418 = vmatprep.subr.mxu0 %v359
        %419 = vmatpush1.msra.mxu0 %v358
        %420 = vmatprep.subr.mxu0 %v368
        %421 = vmatpush1.msra.mxu0 %v367
        %422 = vmatprep.subr.mxu0 %v329
        %423 = vmatpush1.msra.mxu0 %v328
        %424 = vmatprep.subr.mxu0 %v377
        %425 = vmatpush1.msra.mxu0 %v376
        %426 = vmatprep.subr.mxu0 %v386
        %427 = vmatpush1.msra.mxu0 %v385
        %428 = vmatprep.subr.mxu0 %v395
        %429 = vmatpush1.msra.mxu0 %v394
        %430 = vmatprep.subr.mxu0 %v404
        %431 = vmatpush1.msra.mxu0 %v403
        %432 = vmatprep.subr.mxu0 0.0
        %433 = vmatpush1.msra.mxu0 0.0
        %434 = vmatprep.subr.mxu0 0.0
        %435 = vmatpush1.msra.mxu0 0.0
        %436 = vmatprep.subr.mxu0 0.0
        %437 = vmatpush1.msra.mxu0 0.0
        %438 = vmatprep.subr.mxu0 0.0
        %439 = vmatpush1.msra.mxu0 0.0
        %440 = vmatprep.subr.mxu0 0.0
        %441 = vmatpush1.msra.mxu0 0.0
        %442 = vmatprep.subr.mxu0 0.0
        %443 = vmatpush1.msra.mxu0 0.0
        %444 = vmatprep.subr.mxu0 0.0
        %445 = vmatpush1.msra.mxu0 0.0
        %446 = vmatprep.subr.mxu0 0.0
        %447 = vmatpush1.msra.mxu0 0.0
        %448 = vmatprep.subr.mxu0 0.0
        %449 = vmatpush1.msra.mxu0 0.0
        %450 = vmatprep.subr.mxu0 0.0
        %451 = vmatpush1.msra.mxu0 0.0
        %452 = vmatprep.subr.mxu0 0.0
        %453 = vmatpush1.msra.mxu0 0.0
        %454 = vmatprep.subr.mxu0 0.0
        %455 = vmatpush1.msra.mxu0 0.0
        %456 = vmatprep.subr.mxu0 0.0
        %457 = vmatpush1.msra.mxu0 0.0
        %458 = vmatprep.subr.mxu0 0.0
        %459 = vmatpush1.msra.mxu0 0.0
        %460 = vmatprep.subr.mxu0 0.0
        %461 = vmatpush1.msra.mxu0 0.0
        %462 = vmatprep.subr.mxu0 0.0
        %463 = vmatpush1.msra.mxu0 0.0
        %464 = vmatprep.subr.mxu0 0.0
        %465 = vmatpush1.msra.mxu0 0.0
        %466 = vmatprep.subr.mxu0 0.0
        %467 = vmatpush1.msra.mxu0 0.0
        %468 = vmatprep.subr.mxu0 0.0
        %469 = vmatpush1.msra.mxu0 0.0
        %470 = vmatprep.subr.mxu0 0.0
        %471 = vmatpush1.msra.mxu0 0.0
        %472 = vmatprep.subr.mxu0 0.0
        %473 = vmatpush1.msra.mxu0 0.0
        %474 = vmatprep.subr.mxu0 0.0
        %475 = vmatpush1.msra.mxu0 0.0
        %476 = vmatprep.subr.mxu0 0.0
        %477 = vmatpush1.msra.mxu0 0.0
        %478 = vmatprep.mubr.f32.mxu0 0.0
        %479 = vmatmul.mubr.f32.gmra.mrb[0].mxu0 %v412
        %v480 = vpop.f32.mrb[0].mxu0
        %v481 = vadd.f32 %v408, %v480
        %v482 = vpop.f32.mrb[0].mxu0
        %v483 = vadd.f32 %v408, %v482
        %484 = vdwg.mxu0
        %v485 = vmax.f32 %v481, 0.0
        %v486 = vmax.f32 %v483, 0.0
        %487 = vrot.lane.b32.xlu0 %v485, 17
        %v488 = vpop.permute.xlu0 %487
        %489 = vrot.lane.b32.xlu0 %v486, 17
        %v490 = vpop.permute.xlu0 %489
        %v491 = vsel %vm337, %v488, %v490
        %v492 = vsel %vm337, %v490, %v488
        %v493 = vmul.f32 %v492, %v251
        %v494 = vmul.f32 %v491, %v255
        %495 = vrot.lane.b32.xlu0 %v485, 16
        %v496 = vpop.permute.xlu0 %495
        %497 = vrot.lane.b32.xlu0 %v486, 16
        %v498 = vpop.permute.xlu0 %497
        %v499 = vsel %vm346, %v496, %v498
        %v500 = vsel %vm346, %v498, %v496
        %v501 = vmul.f32 %v500, %v259
        %v502 = vmul.f32 %v499, %v263
        %503 = vrot.lane.b32.xlu0 %v485, 15
        %v504 = vpop.permute.xlu0 %503
        %505 = vrot.lane.b32.xlu0 %v486, 15
        %v506 = vpop.permute.xlu0 %505
        %v507 = vsel %vm355, %v504, %v506
        %v508 = vsel %vm355, %v506, %v504
        %v509 = vmul.f32 %v508, %v267
        %v510 = vmul.f32 %v507, %v271
        %511 = vrot.lane.b32.xlu0 %v485, 1
        %v512 = vpop.permute.xlu0 %511
        %513 = vrot.lane.b32.xlu0 %v486, 1
        %v514 = vpop.permute.xlu0 %513
        %v515 = vsel %vm364, %v512, %v514
        %v516 = vsel %vm364, %v514, %v512
        %v517 = vmul.f32 %v516, %v275
        %v518 = vmul.f32 %v515, %v279
        %519 = vrot.lane.b32.xlu0 %v485, 127
        %v520 = vpop.permute.xlu0 %519
        %521 = vrot.lane.b32.xlu0 %v486, 127
        %v522 = vpop.permute.xlu0 %521
        %v523 = vsel %vm373, %v520, %v522
        %v524 = vsel %vm373, %v522, %v520
        %v525 = vmul.f32 %v523, %v283
        %v526 = vmul.f32 %v524, %v287
        %527 = vrot.lane.b32.xlu0 %v485, 113
        %v528 = vpop.permute.xlu0 %527
        %529 = vrot.lane.b32.xlu0 %v486, 113
        %v530 = vpop.permute.xlu0 %529
        %v531 = vsel %vm382, %v528, %v530
        %v532 = vsel %vm382, %v530, %v528
        %v533 = vmul.f32 %v531, %v291
        %v534 = vmul.f32 %v532, %v295
        %535 = vrot.lane.b32.xlu0 %v485, 112
        %v536 = vpop.permute.xlu0 %535
        %537 = vrot.lane.b32.xlu0 %v486, 112
        %v538 = vpop.permute.xlu0 %537
        %v539 = vsel %vm391, %v536, %v538
        %v540 = vsel %vm391, %v538, %v536
        %v541 = vmul.f32 %v539, %v299
        %v542 = vmul.f32 %v540, %v303
        %543 = vrot.lane.b32.xlu0 %v485, 111
        %v544 = vpop.permute.xlu0 %543
        %545 = vrot.lane.b32.xlu0 %v486, 111
        %v546 = vpop.permute.xlu0 %545
        %v547 = vsel %vm400, %v544, %v546
        %v548 = vsel %vm400, %v546, %v544
        %v549 = vmul.f32 %v547, %v307
        %v550 = vmul.f32 %v548, %v311
        %v551 = vld [vmem:[%s4] sm:$0xff]
        %vm552 = vcmask 654336
        %v554 = vsel %vm552, %v551, 0
        %556 = vmatprep.subr.mxu0 %v494
        %557 = vmatpush1.msra.mxu0 %v493
        %558 = vmatprep.subr.mxu0 %v502
        %559 = vmatpush1.msra.mxu0 %v501
        %560 = vmatprep.subr.mxu0 %v510
        %561 = vmatpush1.msra.mxu0 %v509
        %562 = vmatprep.subr.mxu0 %v518
        %563 = vmatpush1.msra.mxu0 %v517
        %564 = vmatprep.subr.mxu0 %v486
        %565 = vmatpush1.msra.mxu0 %v485
        %566 = vmatprep.subr.mxu0 %v526
        %567 = vmatpush1.msra.mxu0 %v525
        %568 = vmatprep.subr.mxu0 %v534
        %569 = vmatpush1.msra.mxu0 %v533
        %570 = vmatprep.subr.mxu0 %v542
        %571 = vmatpush1.msra.mxu0 %v541
        %572 = vmatprep.subr.mxu0 %v550
        %573 = vmatpush1.msra.mxu0 %v549
        %574 = vmatprep.subr.mxu0 %v329
        %575 = vmatpush1.msra.mxu0 %v328
        %576 = vmatprep.subr.mxu0 0.0
        %577 = vmatpush1.msra.mxu0 0.0
        %578 = vmatprep.subr.mxu0 0.0
        %579 = vmatpush1.msra.mxu0 0.0
        %580 = vmatprep.subr.mxu0 0.0
        %581 = vmatpush1.msra.mxu0 0.0
        %582 = vmatprep.subr.mxu0 0.0
        %583 = vmatpush1.msra.mxu0 0.0
        %584 = vmatprep.subr.mxu0 0.0
        %585 = vmatpush1.msra.mxu0 0.0
        %586 = vmatprep.subr.mxu0 0.0
        %587 = vmatpush1.msra.mxu0 0.0
        %588 = vmatprep.subr.mxu0 0.0
        %589 = vmatpush1.msra.mxu0 0.0
        %590 = vmatprep.subr.mxu0 0.0
        %591 = vmatpush1.msra.mxu0 0.0
        %592 = vmatprep.subr.mxu0 0.0
        %593 = vmatpush1.msra.mxu0 0.0
        %594 = vmatprep.subr.mxu0 0.0
        %595 = vmatpush1.msra.mxu0 0.0
        %596 = vmatprep.subr.mxu0 0.0
        %597 = vmatpush1.msra.mxu0 0.0
        %598 = vmatprep.subr.mxu0 0.0
        %599 = vmatpush1.msra.mxu0 0.0
        %600 = vmatprep.subr.mxu0 0.0
        %601 = vmatpush1.msra.mxu0 0.0
        %602 = vmatprep.subr.mxu0 0.0
        %603 = vmatpush1.msra.mxu0 0.0
        %604 = vmatprep.subr.mxu0 0.0
        %605 = vmatpush1.msra.mxu0 0.0
        %606 = vmatprep.subr.mxu0 0.0
        %607 = vmatpush1.msra.mxu0 0.0
        %608 = vmatprep.subr.mxu0 0.0
        %609 = vmatpush1.msra.mxu0 0.0
        %610 = vmatprep.subr.mxu0 0.0
        %611 = vmatpush1.msra.mxu0 0.0
        %612 = vmatprep.subr.mxu0 0.0
        %613 = vmatpush1.msra.mxu0 0.0
        %614 = vmatprep.subr.mxu0 0.0
        %615 = vmatpush1.msra.mxu0 0.0
        %616 = vmatprep.subr.mxu0 0.0
        %617 = vmatpush1.msra.mxu0 0.0
        %618 = vmatprep.subr.mxu0 0.0
        %619 = vmatpush1.msra.mxu0 0.0
        %620 = vmatprep.mubr.f32.mxu0 0.0
        %621 = vmatmul.mubr.f32.gmra.mrb[0].mxu0 %v554
        %v622 = vpop.f32.mrb[0].mxu0
        %v623 = vadd.f32 0.0, %v622
        %v624 = vpop.f32.mrb[0].mxu0
        %v625 = vadd.f32 0.0, %v624
        %626 = vdwg.mxu0
        %627 = vst [vmem:[%s240] sm:$0xff] %v623
        %628 = vst [vmem:[%s240 + $0x8] sm:$0xff] %v625
        %s629 = sand.u32 %s140, 1
        %s630 = scalar_lea.sflag [#allocation4], %s629
        %s631 = sand.u32 %s140, 1
        %s632 = smul.addr %s631, 16
        %s633 = scalar_lea.vmem [#allocation5], %s632
        // Predicated region
        $region45: #{tpu_custom_call.1} parent=39 // pred_check
          %p634 = pneg %p150
        $region46: #{tpu_custom_call.1} parent=39 // pred_check_branch
          %636 = sbr.rel (%p634) target = $region48
        $region47: #{tpu_custom_call.1} parent=39 // pred_region
          %s637 = smul.u32 2, %s22
          %s639 = ssub.s32 256, 256
          %640 = vsyncadd %s630, %s639
          %s641 = smul.addr %s637, 128
          %s642 = scalar_lea.hbm %s5, %s641
          %s644 = sshll.u32 %s633, 4
          %s645 = int_to_ptr.vmem [resolvable:$true] %s644
          %647 = dma.vmem_to_hbm [thread:$0]  %s645, 256, %s642, %s630
        $region48: #{tpu_custom_call.1} parent=39 // pred_fallthru
          _
      $region40: #{tpu_custom_call.1} parent=5 // pred_fallthru
        _
      %p648 = scmp.le.s32.totalorder 2, %s17
      // Predicated region
      $region49: #{tpu_custom_call.1} parent=5 // pred_check
        %p649 = pneg %p648
      $region50: #{tpu_custom_call.1} parent=5 // pred_check_branch
        %651 = sbr.rel (%p649) target = $region52
      $region51: #{tpu_custom_call.1} parent=5 // pred_region
        %s652 = ssub.s32 %s17, 2
        // Predicated region
        $region53: #{tpu_custom_call.1} parent=51 // pred_check
          %p653 = pneg %p156
        $region54: #{tpu_custom_call.1} parent=51 // pred_check_branch
          %655 = sbr.rel (%p653) target = $region56
        $region55: #{tpu_custom_call.1} parent=51 // pred_region
          %s656 = sand.u32 %s141, 1
          %s657 = scalar_lea.sflag [#allocation4], %s656
          %s658 = sand.u32 %s141, 1
          %s659 = smul.addr %s658, 16
          %s660 = scalar_lea.vmem [#allocation5], %s659
          %661 = dma.done %s657, 256
        $region56: #{tpu_custom_call.1} parent=51 // pred_fallthru
          _
      $region52: #{tpu_custom_call.1} parent=5 // pred_fallthru
        _
    $region6: #{tpu_custom_call.1} parent=1 // loop_footer
      %s21 = sadd.s32 1, %s17
    $region7: #{tpu_custom_call.1} parent=1 // loop_footer_branch
      %16 = sbr.rel target = $region3
    $region8: #{tpu_custom_call.1} parent=1 // loop_exit
      _
    %662 = vsyncpa [#allocation3], 1
    %s663 = scalar_lea.sflag [#allocation3], 1
    %664 = vsyncpa %s663, 1
    %665 = vsyncpa [#allocation4], 1
    %s666 = scalar_lea.sflag [#allocation4], 1
    %667 = vsyncpa %s666, 1

</llo_original>
